<compile_context>
chip_gen: v7x
topology: tpu7x:2x2x1
jax: 0.10.0
libtpu: 0.0.40
codegen_flags: <defaults>
</compile_context>

<pallas_src>
import functools

import jax
import jax.numpy as jnp
from jax.experimental import pallas as pl
from jax.experimental.pallas import tpu as pltpu


# ------------------------------ fused kernel --------------------------------

def _residual_kernel(*refs, H, W, cin, cout, bm, use_1x1conv):
    if use_1x1conv:
        (x_ref, w1_ref, s1_ref, t1_ref, w2_ref, s2_ref, t2_ref,
         w3_ref, b3_ref, o_ref, y1p_ref) = refs
    else:
        (x_ref, w1_ref, s1_ref, t1_ref, w2_ref, s2_ref, t2_ref,
         o_ref, y1p_ref) = refs
        w3_ref = b3_ref = None

    Hp = H + 2           # per-image padded height (one zero row top/bottom)
    Ht = bm * Hp         # stacked slab height (bm images per grid step)
    Hc = Ht - 2          # rows the banded matmuls produce (incl. junk boundary rows)

    xp = x_ref[0]        # (Ht, W*cin) bf16, lane-dense, H-padded per image

    # ---- conv1 (3x3, pad 1) as 3 banded bf16 matmuls, f32 accumulation ------
    a0 = jnp.dot(xp[0:Hc, :],     w1_ref[0], preferred_element_type=jnp.float32)
    a1 = jnp.dot(xp[1:Hc + 1, :], w1_ref[1], preferred_element_type=jnp.float32)
    a2 = jnp.dot(xp[2:Hc + 2, :], w1_ref[2], preferred_element_type=jnp.float32)
    acc1 = (a0 + a1) + a2                                        # (Hc, W*cout) f32
    y1 = jnp.maximum(acc1 * s1_ref[...] + t1_ref[...], 0.0)      # BN1 + ReLU (f32)

    # ---- stage y1 (bf16) for conv2: one bulk full-lane store + zero pad rows -
    y1p_ref[1:Ht - 1, :] = y1.astype(y1p_ref.dtype)
    zrow = jnp.zeros((1, W * cout), y1p_ref.dtype)
    for b in range(bm):                                          # 2*bm tiny row stores
        y1p_ref[b * Hp:b * Hp + 1, :] = zrow
        y1p_ref[b * Hp + H + 1:b * Hp + H + 2, :] = zrow

    # ---- conv2 (3x3, pad 1) as 3 banded bf16 matmuls + BN2 -------------------
    y1p = y1p_ref[...]                                           # (Ht, W*cout) bf16
    b0 = jnp.dot(y1p[0:Hc, :],     w2_ref[0], preferred_element_type=jnp.float32)
    b1 = jnp.dot(y1p[1:Hc + 1, :], w2_ref[1], preferred_element_type=jnp.float32)
    b2 = jnp.dot(y1p[2:Hc + 2, :], w2_ref[2], preferred_element_type=jnp.float32)
    y2 = ((b0 + b1) + b2) * s2_ref[...] + t2_ref[...]            # (Hc, W*cout) f32

    # ---- shortcut branch -----------------------------------------------------
    xc = xp[1:Hc + 1, :]                                         # un-shifted center slab
    if use_1x1conv:
        sc = jnp.dot(xc, w3_ref[...],
                     preferred_element_type=jnp.float32) + b3_ref[...]
    else:
        sc = xc.astype(jnp.float32)                              # identity (cin == cout)

    # Single full-lane, unmasked output store (junk rows dropped on the host).
    o_ref[0] = jnp.maximum(y2 + sc, 0.0).astype(o_ref.dtype)


# ------------------------------ host wrapper ---------------------------------

def _banded_weights(k_hwio, W):
    """(3, 3, Cin, Cout) HWIO kernel -> (3, W*Cin, W*Cout) block-tridiagonal
    per-dy matrices.  Block (w_in, w_out) is K[dy, w_in - w_out + 1]; the
    missing blocks at the W borders implement the width-axis zero padding."""
    kh, kw, cin, cout = k_hwio.shape
    mats = []
    for dy in range(kh):
        m = jnp.zeros((W * cin, W * cout), k_hwio.dtype)
        for dx in range(kw):
            m = m + jnp.kron(jnp.eye(W, k=1 - dx, dtype=k_hwio.dtype), k_hwio[dy, dx])
        mats.append(m)
    return jnp.stack(mats)


def _pick_block_batch(B, H):
    """Largest divisor of B with bm*(H+2) <= ~128 rows: widens the matmul M
    dimension toward the MXU width and amortizes per-grid-step overhead."""
    target = max(1, 128 // (H + 2))
    bm = 1
    for d in range(1, min(B, target) + 1):
        if B % d == 0:
            bm = d
    return bm


def residual_forward(x_nchw, p, use_1x1conv, strides=1, eps=1e-5, block_batch=None):
    assert strides == 1, "TODO(synk): strides != 1 not implemented"
    B, Cin, H, W = x_nchw.shape
    Cout = p["k1"].shape[0]
    if not use_1x1conv:
        assert Cin == Cout, "identity shortcut requires Cin == Cout"

    bm = block_batch or _pick_block_batch(B, H)
    assert B % bm == 0
    G = B // bm
    Hp, Ht, Hc = H + 2, bm * (H + 2), bm * (H + 2) - 2

    # NCHW -> NHWC, zero-pad H only (the banded weights handle W padding),
    # flatten (W, C) onto lanes, stack bm images along sublanes, cast to bf16.
    x = jnp.transpose(x_nchw, (0, 2, 3, 1))
    xp = jnp.pad(x, ((0, 0), (1, 1), (0, 0), (0, 0)))
    xp = xp.reshape(G, Ht, W * Cin).astype(jnp.bfloat16)

    # Conv weights: PyTorch OIHW -> HWIO -> banded per-dy matrices (bf16).
    w1 = _banded_weights(jnp.transpose(p["k1"], (2, 3, 1, 0)), W).astype(jnp.bfloat16)
    w2 = _banded_weights(jnp.transpose(p["k2"], (2, 3, 1, 0)), W).astype(jnp.bfloat16)

    # Fold conv bias + eval-mode BatchNorm into per-channel scale/shift (f32).
    s1 = p["g1"] / jnp.sqrt(p["v1"] + eps)
    t1 = (p["b1"] - p["m1"]) * s1 + p["be1"]
    s2 = p["g2"] / jnp.sqrt(p["v2"] + eps)
    t2 = (p["b2"] - p["m2"]) * s2 + p["be2"]
    s1t, t1t = jnp.tile(s1, W)[None, :], jnp.tile(t1, W)[None, :]
    s2t, t2t = jnp.tile(s2, W)[None, :], jnp.tile(t2, W)[None, :]

    args = [xp, w1, s1t, t1t, w2, s2t, t2t]
    in_specs = [
        pl.BlockSpec((1, Ht, W * Cin), lambda g: (g, 0, 0)),
        pl.BlockSpec((3, W * Cin, W * Cout), lambda g: (0, 0, 0)),
        pl.BlockSpec((1, W * Cout), lambda g: (0, 0)),
        pl.BlockSpec((1, W * Cout), lambda g: (0, 0)),
        pl.BlockSpec((3, W * Cout, W * Cout), lambda g: (0, 0, 0)),
        pl.BlockSpec((1, W * Cout), lambda g: (0, 0)),
        pl.BlockSpec((1, W * Cout), lambda g: (0, 0)),
    ]
    if use_1x1conv:
        k3 = jnp.transpose(p["k3"], (2, 3, 1, 0))[0, 0]            # (Cin, Cout)
        w3 = jnp.kron(jnp.eye(W, dtype=k3.dtype), k3).astype(jnp.bfloat16)
        b3t = jnp.tile(p["b3"], W)[None, :]
        args += [w3, b3t]
        in_specs += [
            pl.BlockSpec((W * Cin, W * Cout), lambda g: (0, 0)),
            pl.BlockSpec((1, W * Cout), lambda g: (0, 0)),
        ]

    kernel = functools.partial(_residual_kernel, H=H, W=W, cin=Cin, cout=Cout,
                               bm=bm, use_1x1conv=use_1x1conv)
    y = pl.pallas_call(
        kernel,
        out_shape=jax.ShapeDtypeStruct((G, Hc, W * Cout), jnp.float32),
        grid=(G,),
        in_specs=in_specs,
        out_specs=pl.BlockSpec((1, Hc, W * Cout), lambda g: (g, 0, 0)),
        scratch_shapes=[pltpu.VMEM((Ht, W * Cout), jnp.bfloat16)],
        compiler_params=pltpu.CompilerParams(dimension_semantics=("parallel",)),
        # NOTE: at production sizes (large W*C) raise vmem_limit_bytes and/or
        # tile along W; weights stay single-buffered by construction (constant
        # index_map), so no pipeline_mode override is needed here.
    )(*args)

    # Drop the per-image junk boundary rows of the stacked conv, back to NCHW.
    y = jnp.stack([y[:, b * Hp:b * Hp + H, :] for b in range(bm)], axis=1)
    y = y.reshape(B, H, W, Cout)
    return jnp.transpose(y, (0, 3, 1, 2))


# ------------------------------ parameter setup ------------------------------

def init_params(key, cin, cout, use_1x1conv):
    ks = jax.random.split(key, 14)
    std = 0.1
    p = {
        "k1": std * jax.random.normal(ks[0], (cout, cin, 3, 3), jnp.float32),
        "b1": std * jax.random.normal(ks[1], (cout,), jnp.float32),
        "k2": std * jax.random.normal(ks[2], (cout, cout, 3, 3), jnp.float32),
        "b2": std * jax.random.normal(ks[3], (cout,), jnp.float32),
        "g1": 1.0 + 0.1 * jax.random.normal(ks[4], (cout,), jnp.float32),
        "be1": 0.1 * jax.random.normal(ks[5], (cout,), jnp.float32),
        "m1": 0.1 * jax.random.normal(ks[6], (cout,), jnp.float32),
        "v1": jax.random.uniform(ks[7], (cout,), jnp.float32, 0.5, 1.5),
        "g2": 1.0 + 0.1 * jax.random.normal(ks[8], (cout,), jnp.float32),
        "be2": 0.1 * jax.random.normal(ks[9], (cout,), jnp.float32),
        "m2": 0.1 * jax.random.normal(ks[10], (cout,), jnp.float32),
        "v2": jax.random.uniform(ks[11], (cout,), jnp.float32, 0.5, 1.5),
    }
    if use_1x1conv:
        p["k3"] = std * jax.random.normal(ks[12], (cout, cin, 1, 1), jnp.float32)
        p["b3"] = std * jax.random.normal(ks[13], (cout,), jnp.float32)
    return p


# ------------------------------ pure-JAX reference ---------------------------

def _ref_forward(x, p, use_1x1conv, eps=1e-5, match_bf16=False):
    """Reference forward.  match_bf16=True mimics the kernel's bf16 matmul
    operands (f32 accumulation) so the comparison tolerance can stay tight."""
    dn = ("NCHW", "OIHW", "NCHW")
    cast = (lambda a: a.astype(jnp.bfloat16)) if match_bf16 else (lambda a: a)

    def conv(xx, k, b, pad):
        y = jax.lax.conv_general_dilated(
            cast(xx), cast(k), (1, 1), ((pad, pad), (pad, pad)),
            dimension_numbers=dn, preferred_element_type=jnp.float32,
            precision=jax.lax.Precision.HIGHEST)
        return y + b[None, :, None, None]

    def bn(xx, g, be, m, v):
        s = g / jnp.sqrt(v + eps)
        return (xx - m[None, :, None, None]) * s[None, :, None, None] + be[None, :, None, None]

    y = jax.nn.relu(bn(conv(x, p["k1"], p["b1"], 1), p["g1"], p["be1"], p["m1"], p["v1"]))
    y = bn(conv(y, p["k2"], p["b2"], 1), p["g2"], p["be2"], p["m2"], p["v2"])
    if use_1x1conv:
        xs = conv(x, p["k3"], p["b3"], 0)
    else:
        xs = cast(x).astype(jnp.float32)
    return jax.nn.relu(y + xs)


# ----------------------------------- main ------------------------------------

if __name__ == "__main__":
    key = jax.random.PRNGKey(0)
    kx1, kx2, kp1, kp2 = jax.random.split(key, 4)
    B, H, W = 2, 16, 16

    # Config A: module defaults (use_1x1conv=False, strides=1), identity shortcut.
    C = 8
    xA = jax.random.normal(kx1, (B, C, H, W), jnp.float32)
    pA = init_params(kp1, C, C, use_1x1conv=False)
    outA = jax.block_until_ready(residual_forward(xA, pA, use_1x1conv=False))
    assert outA.shape == (B, C, H, W)
    errA = float(jnp.max(jnp.abs(outA - _ref_forward(xA, pA, False, match_bf16=True))))
    errA32 = float(jnp.max(jnp.abs(outA - _ref_forward(xA, pA, False, match_bf16=False))))
    assert errA < 5e-3, ("bf16-matched mismatch (A)", errA)
    assert errA32 < 1e-1, ("f32 sanity mismatch (A)", errA32)

    # Config B: 1x1-conv projection shortcut, Cin=4 -> Cout=8, input (2, 4, 16, 16).
    Cin, Cout = 4, 8
    xB = jax.random.normal(kx2, (B, Cin, H, W), jnp.float32)
    pB = init_params(kp2, Cin, Cout, use_1x1conv=True)
    outB = jax.block_until_ready(residual_forward(xB, pB, use_1x1conv=True))
    assert outB.shape == (B, Cout, H, W)
    errB = float(jnp.max(jnp.abs(outB - _ref_forward(xB, pB, True, match_bf16=True))))
    errB32 = float(jnp.max(jnp.abs(outB - _ref_forward(xB, pB, True, match_bf16=False))))
    assert errB < 5e-3, ("bf16-matched mismatch (B)", errB)
    assert errB32 < 1e-1, ("f32 sanity mismatch (B)", errB32)

    print("KERNEL_OK")
</pallas_src>

<mosaic_0001>
module attributes {stable_mosaic.version = 11 : i64} {
  func.func @_residual_kernel(%arg0: i32, %arg1: memref<1x36x128xbf16, #tpu.memory_space<vmem>>, %arg2: memref<3x128x128xbf16, #tpu.memory_space<vmem>>, %arg3: memref<1x128xf32, #tpu.memory_space<vmem>>, %arg4: memref<1x128xf32, #tpu.memory_space<vmem>>, %arg5: memref<3x128x128xbf16, #tpu.memory_space<vmem>>, %arg6: memref<1x128xf32, #tpu.memory_space<vmem>>, %arg7: memref<1x128xf32, #tpu.memory_space<vmem>>, %arg8: memref<1x34x128xf32, #tpu.memory_space<vmem>>, %arg9: memref<36x128xbf16, #tpu.memory_space<vmem>>) attributes {dimension_semantics = [#tpu.dimension_semantics<parallel>], iteration_bounds = array<i64: 1>, scalar_prefetch = 0 : i64, scratch_operands = 1 : i64, tpu.core_type = #tpu.core_type<tc>, window_params = [{transform_indices = @transform_0, window_bounds = array<i64: 1, 36, 128>}, {pipeline_mode = #tpu.pipeline_mode<synchronous>, transform_indices = @transform_1, window_bounds = array<i64: 3, 128, 128>}, {pipeline_mode = #tpu.pipeline_mode<synchronous>, transform_indices = @transform_2, window_bounds = array<i64: 1, 128>}, {pipeline_mode = #tpu.pipeline_mode<synchronous>, transform_indices = @transform_3, window_bounds = array<i64: 1, 128>}, {pipeline_mode = #tpu.pipeline_mode<synchronous>, transform_indices = @transform_4, window_bounds = array<i64: 3, 128, 128>}, {pipeline_mode = #tpu.pipeline_mode<synchronous>, transform_indices = @transform_5, window_bounds = array<i64: 1, 128>}, {pipeline_mode = #tpu.pipeline_mode<synchronous>, transform_indices = @transform_6, window_bounds = array<i64: 1, 128>}, {transform_indices = @transform_7, window_bounds = array<i64: 1, 34, 128>}]} {
    %c0 = arith.constant 0 : index
    %c0_0 = arith.constant 0 : index
    %c0_1 = arith.constant 0 : index
    %0 = vector.load %arg1[%c0, %c0_0, %c0_1] : memref<1x36x128xbf16, #tpu.memory_space<vmem>>, vector<1x36x128xbf16>
    %1 = vector.shape_cast %0 : vector<1x36x128xbf16> to vector<36x128xbf16>
    %2 = vector.extract_strided_slice %1 {offsets = [0, 0], sizes = [34, 128], strides = [1, 1]} : vector<36x128xbf16> to vector<34x128xbf16>
    %c0_2 = arith.constant 0 : index
    %c0_3 = arith.constant 0 : index
    %c0_4 = arith.constant 0 : index
    %3 = vector.load %arg2[%c0_2, %c0_3, %c0_4] : memref<3x128x128xbf16, #tpu.memory_space<vmem>>, vector<1x128x128xbf16>
    %4 = vector.shape_cast %3 : vector<1x128x128xbf16> to vector<128x128xbf16>
    %cst = arith.constant dense<0.000000e+00> : vector<34x128xf32>
    %5 = tpu.matmul %2, %4, %cst {dimension_numbers = #tpu.dot_dimension_numbers<[1], [0], [0], [1], [0, 0, 1, 1], [], []>} : vector<34x128xbf16>, vector<128x128xbf16>, vector<34x128xf32> -> vector<34x128xf32>
    %6 = vector.extract_strided_slice %1 {offsets = [1, 0], sizes = [34, 128], strides = [1, 1]} : vector<36x128xbf16> to vector<34x128xbf16>
    %c1 = arith.constant 1 : index
    %c0_5 = arith.constant 0 : index
    %c0_6 = arith.constant 0 : index
    %7 = vector.load %arg2[%c1, %c0_5, %c0_6] : memref<3x128x128xbf16, #tpu.memory_space<vmem>>, vector<1x128x128xbf16>
    %8 = vector.shape_cast %7 : vector<1x128x128xbf16> to vector<128x128xbf16>
    %cst_7 = arith.constant dense<0.000000e+00> : vector<34x128xf32>
    %9 = tpu.matmul %6, %8, %cst_7 {dimension_numbers = #tpu.dot_dimension_numbers<[1], [0], [0], [1], [0, 0, 1, 1], [], []>} : vector<34x128xbf16>, vector<128x128xbf16>, vector<34x128xf32> -> vector<34x128xf32>
    %10 = vector.extract_strided_slice %1 {offsets = [2, 0], sizes = [34, 128], strides = [1, 1]} : vector<36x128xbf16> to vector<34x128xbf16>
    %c2 = arith.constant 2 : index
    %c0_8 = arith.constant 0 : index
    %c0_9 = arith.constant 0 : index
    %11 = vector.load %arg2[%c2, %c0_8, %c0_9] : memref<3x128x128xbf16, #tpu.memory_space<vmem>>, vector<1x128x128xbf16>
    %12 = vector.shape_cast %11 : vector<1x128x128xbf16> to vector<128x128xbf16>
    %cst_10 = arith.constant dense<0.000000e+00> : vector<34x128xf32>
    %13 = tpu.matmul %10, %12, %cst_10 {dimension_numbers = #tpu.dot_dimension_numbers<[1], [0], [0], [1], [0, 0, 1, 1], [], []>} : vector<34x128xbf16>, vector<128x128xbf16>, vector<34x128xf32> -> vector<34x128xf32>
    %14 = arith.addf %5, %9 : vector<34x128xf32>
    %15 = arith.addf %14, %13 : vector<34x128xf32>
    %c0_11 = arith.constant 0 : index
    %c0_12 = arith.constant 0 : index
    %16 = vector.load %arg3[%c0_11, %c0_12] : memref<1x128xf32, #tpu.memory_space<vmem>>, vector<1x128xf32>
    %17 = vector.broadcast %16 : vector<1x128xf32> to vector<34x128xf32>
    %18 = arith.mulf %15, %17 : vector<34x128xf32>
    %c0_13 = arith.constant 0 : index
    %c0_14 = arith.constant 0 : index
    %19 = vector.load %arg4[%c0_13, %c0_14] : memref<1x128xf32, #tpu.memory_space<vmem>>, vector<1x128xf32>
    %20 = vector.broadcast %19 : vector<1x128xf32> to vector<34x128xf32>
    %21 = arith.addf %18, %20 : vector<34x128xf32>
    %cst_15 = arith.constant 0.000000e+00 : f32
    %22 = vector.broadcast %cst_15 : f32 to vector<34x128xf32>
    %23 = arith.maximumf %21, %22 : vector<34x128xf32>
    %24 = arith.truncf %23 : vector<34x128xf32> to vector<34x128xbf16>
    %c1_16 = arith.constant 1 : index
    %c0_17 = arith.constant 0 : index
    %25 = vector.load %arg9[%c1_16, %c0_17] : memref<36x128xbf16, #tpu.memory_space<vmem>>, vector<34x128xbf16>
    tpu.vector_store %arg9[%c1_16, %c0_17], %24 {strides = array<i32>} : memref<36x128xbf16, #tpu.memory_space<vmem>>, vector<34x128xbf16>,
    %cst_18 = arith.constant 0.000000e+00 : bf16
    %26 = vector.broadcast %cst_18 : bf16 to vector<1x128xbf16>
    %c0_19 = arith.constant 0 : index
    %c0_20 = arith.constant 0 : index
    %27 = vector.load %arg9[%c0_19, %c0_20] : memref<36x128xbf16, #tpu.memory_space<vmem>>, vector<1x128xbf16>
    tpu.vector_store %arg9[%c0_19, %c0_20], %26 {strides = array<i32>} : memref<36x128xbf16, #tpu.memory_space<vmem>>, vector<1x128xbf16>,
    %c17 = arith.constant 17 : index
    %c0_21 = arith.constant 0 : index
    %28 = vector.load %arg9[%c17, %c0_21] : memref<36x128xbf16, #tpu.memory_space<vmem>>, vector<1x128xbf16>
    tpu.vector_store %arg9[%c17, %c0_21], %26 {strides = array<i32>} : memref<36x128xbf16, #tpu.memory_space<vmem>>, vector<1x128xbf16>,
    %c18 = arith.constant 18 : index
    %c0_22 = arith.constant 0 : index
    %29 = vector.load %arg9[%c18, %c0_22] : memref<36x128xbf16, #tpu.memory_space<vmem>>, vector<1x128xbf16>
    tpu.vector_store %arg9[%c18, %c0_22], %26 {strides = array<i32>} : memref<36x128xbf16, #tpu.memory_space<vmem>>, vector<1x128xbf16>,
    %c35 = arith.constant 35 : index
    %c0_23 = arith.constant 0 : index
    %30 = vector.load %arg9[%c35, %c0_23] : memref<36x128xbf16, #tpu.memory_space<vmem>>, vector<1x128xbf16>
    tpu.vector_store %arg9[%c35, %c0_23], %26 {strides = array<i32>} : memref<36x128xbf16, #tpu.memory_space<vmem>>, vector<1x128xbf16>,
    %c0_24 = arith.constant 0 : index
    %c0_25 = arith.constant 0 : index
    %31 = vector.load %arg9[%c0_24, %c0_25] : memref<36x128xbf16, #tpu.memory_space<vmem>>, vector<36x128xbf16>
    %32 = vector.extract_strided_slice %31 {offsets = [0, 0], sizes = [34, 128], strides = [1, 1]} : vector<36x128xbf16> to vector<34x128xbf16>
    %c0_26 = arith.constant 0 : index
    %c0_27 = arith.constant 0 : index
    %c0_28 = arith.constant 0 : index
    %33 = vector.load %arg5[%c0_26, %c0_27, %c0_28] : memref<3x128x128xbf16, #tpu.memory_space<vmem>>, vector<1x128x128xbf16>
    %34 = vector.shape_cast %33 : vector<1x128x128xbf16> to vector<128x128xbf16>
    %cst_29 = arith.constant dense<0.000000e+00> : vector<34x128xf32>
    %35 = tpu.matmul %32, %34, %cst_29 {dimension_numbers = #tpu.dot_dimension_numbers<[1], [0], [0], [1], [0, 0, 1, 1], [], []>} : vector<34x128xbf16>, vector<128x128xbf16>, vector<34x128xf32> -> vector<34x128xf32>
    %36 = vector.extract_strided_slice %31 {offsets = [1, 0], sizes = [34, 128], strides = [1, 1]} : vector<36x128xbf16> to vector<34x128xbf16>
    %c1_30 = arith.constant 1 : index
    %c0_31 = arith.constant 0 : index
    %c0_32 = arith.constant 0 : index
    %37 = vector.load %arg5[%c1_30, %c0_31, %c0_32] : memref<3x128x128xbf16, #tpu.memory_space<vmem>>, vector<1x128x128xbf16>
    %38 = vector.shape_cast %37 : vector<1x128x128xbf16> to vector<128x128xbf16>
    %cst_33 = arith.constant dense<0.000000e+00> : vector<34x128xf32>
    %39 = tpu.matmul %36, %38, %cst_33 {dimension_numbers = #tpu.dot_dimension_numbers<[1], [0], [0], [1], [0, 0, 1, 1], [], []>} : vector<34x128xbf16>, vector<128x128xbf16>, vector<34x128xf32> -> vector<34x128xf32>
    %40 = vector.extract_strided_slice %31 {offsets = [2, 0], sizes = [34, 128], strides = [1, 1]} : vector<36x128xbf16> to vector<34x128xbf16>
    %c2_34 = arith.constant 2 : index
    %c0_35 = arith.constant 0 : index
    %c0_36 = arith.constant 0 : index
    %41 = vector.load %arg5[%c2_34, %c0_35, %c0_36] : memref<3x128x128xbf16, #tpu.memory_space<vmem>>, vector<1x128x128xbf16>
    %42 = vector.shape_cast %41 : vector<1x128x128xbf16> to vector<128x128xbf16>
    %cst_37 = arith.constant dense<0.000000e+00> : vector<34x128xf32>
    %43 = tpu.matmul %40, %42, %cst_37 {dimension_numbers = #tpu.dot_dimension_numbers<[1], [0], [0], [1], [0, 0, 1, 1], [], []>} : vector<34x128xbf16>, vector<128x128xbf16>, vector<34x128xf32> -> vector<34x128xf32>
    %44 = arith.addf %35, %39 : vector<34x128xf32>
    %45 = arith.addf %44, %43 : vector<34x128xf32>
    %c0_38 = arith.constant 0 : index
    %c0_39 = arith.constant 0 : index
    %46 = vector.load %arg6[%c0_38, %c0_39] : memref<1x128xf32, #tpu.memory_space<vmem>>, vector<1x128xf32>
    %47 = vector.broadcast %46 : vector<1x128xf32> to vector<34x128xf32>
    %48 = arith.mulf %45, %47 : vector<34x128xf32>
    %c0_40 = arith.constant 0 : index
    %c0_41 = arith.constant 0 : index
    %49 = vector.load %arg7[%c0_40, %c0_41] : memref<1x128xf32, #tpu.memory_space<vmem>>, vector<1x128xf32>
    %50 = vector.broadcast %49 : vector<1x128xf32> to vector<34x128xf32>
    %51 = arith.addf %48, %50 : vector<34x128xf32>
    %52 = vector.extract_strided_slice %1 {offsets = [1, 0], sizes = [34, 128], strides = [1, 1]} : vector<36x128xbf16> to vector<34x128xbf16>
    %53 = arith.extf %52 : vector<34x128xbf16> to vector<34x128xf32>
    %54 = arith.addf %51, %53 : vector<34x128xf32>
    %cst_42 = arith.constant 0.000000e+00 : f32
    %55 = vector.broadcast %cst_42 : f32 to vector<34x128xf32>
    %56 = arith.maximumf %54, %55 : vector<34x128xf32>
    %c0_43 = arith.constant 0 : index
    %c0_44 = arith.constant 0 : index
    %c0_45 = arith.constant 0 : index
    %57 = vector.load %arg8[%c0_43, %c0_44, %c0_45] : memref<1x34x128xf32, #tpu.memory_space<vmem>>, vector<1x34x128xf32>
    %58 = vector.shape_cast %57 : vector<1x34x128xf32> to vector<34x128xf32>
    %59 = vector.shape_cast %56 : vector<34x128xf32> to vector<1x34x128xf32>
    tpu.vector_store %arg8[%c0_43, %c0_44, %c0_45], %59 {strides = array<i32>} : memref<1x34x128xf32, #tpu.memory_space<vmem>>, vector<1x34x128xf32>,
    return
  }
  func.func @transform_0(%arg0: i32) -> (i32, i32, i32) {
    %c0_i32 = arith.constant 0 : i32
    %c0_i32_0 = arith.constant 0 : i32
    %c0_i32_1 = arith.constant 0 : i32
    return %arg0, %c0_i32, %c0_i32_0 : i32, i32, i32
  }
  func.func @transform_1(%arg0: i32) -> (i32, i32, i32) {
    %c0_i32 = arith.constant 0 : i32
    %c0_i32_0 = arith.constant 0 : i32
    %c0_i32_1 = arith.constant 0 : i32
    %c0_i32_2 = arith.constant 0 : i32
    return %c0_i32, %c0_i32_0, %c0_i32_1 : i32, i32, i32
  }
  func.func @transform_2(%arg0: i32) -> (i32, i32) {
    %c0_i32 = arith.constant 0 : i32
    %c0_i32_0 = arith.constant 0 : i32
    %c0_i32_1 = arith.constant 0 : i32
    return %c0_i32, %c0_i32_0 : i32, i32
  }
  func.func @transform_3(%arg0: i32) -> (i32, i32) {
    %c0_i32 = arith.constant 0 : i32
    %c0_i32_0 = arith.constant 0 : i32
    %c0_i32_1 = arith.constant 0 : i32
    return %c0_i32, %c0_i32_0 : i32, i32
  }
  func.func @transform_4(%arg0: i32) -> (i32, i32, i32) {
    %c0_i32 = arith.constant 0 : i32
    %c0_i32_0 = arith.constant 0 : i32
    %c0_i32_1 = arith.constant 0 : i32
    %c0_i32_2 = arith.constant 0 : i32
    return %c0_i32, %c0_i32_0, %c0_i32_1 : i32, i32, i32
  }
  func.func @transform_5(%arg0: i32) -> (i32, i32) {
    %c0_i32 = arith.constant 0 : i32
    %c0_i32_0 = arith.constant 0 : i32
    %c0_i32_1 = arith.constant 0 : i32
    return %c0_i32, %c0_i32_0 : i32, i32
  }
  func.func @transform_6(%arg0: i32) -> (i32, i32) {
    %c0_i32 = arith.constant 0 : i32
    %c0_i32_0 = arith.constant 0 : i32
    %c0_i32_1 = arith.constant 0 : i32
    return %c0_i32, %c0_i32_0 : i32, i32
  }
  func.func @transform_7(%arg0: i32) -> (i32, i32, i32) {
    %c0_i32 = arith.constant 0 : i32
    %c0_i32_0 = arith.constant 0 : i32
    %c0_i32_1 = arith.constant 0 : i32
    return %arg0, %c0_i32, %c0_i32_0 : i32, i32, i32
  }
}

</mosaic_0001>

<llo_original>
// kernel: tpu_custom_call.1
$region0: #{tpu_custom_call.1}
  #allocation0 [shape = 'u32[]', space=smem, size = 0x4, offset = 0x4, fixed_abs, tag = 'smem constant byte address 0x4 - core index']
  #allocation1 [shape = 'u32[144,128]{1,0:T(1,128)}', space=vmem, size = 0x12000, scoped, tag = 'internal scratch']
  #allocation2 [shape = 'bf16[36,128]{1,0:T(8,128)(2,1)}', space=vmem, size = 0x2800, scoped, tag = 'scratch operand']
  %s0 = inlined_call_operand.hbm [shape: bf16[1,36,128], index: 0, kind: input, shape index: {}]
  %s1 = inlined_call_operand.hbm [shape: bf16[3,128,128], index: 1, kind: input, shape index: {}]
  %s2 = inlined_call_operand.vmem [shape: f32[1,128], index: 2, kind: input, shape index: {}]
  %s3 = inlined_call_operand.vmem [shape: f32[1,128], index: 3, kind: input, shape index: {}]
  %s4 = inlined_call_operand.hbm [shape: bf16[3,128,128], index: 4, kind: input, shape index: {}]
  %s5 = inlined_call_operand.vmem [shape: f32[1,128], index: 5, kind: input, shape index: {}]
  %s6 = inlined_call_operand.vmem [shape: f32[1,128], index: 6, kind: input, shape index: {}]
  %s7 = inlined_call_operand.vmem [shape: f32[1,34,128], index: 7, kind: output, shape index: {}]
  %s8 = sld [smem:[#allocation0]]
  $region50: #{tpu_custom_call.1} parent=0
    _
  %s10 = ssub.s32 1, %s8
  %s11 = scalar_select 0, %s10, %s8
  $region1: #{tpu_custom_call.1} parent=0
    #allocation3 [shape = 'u8[10240]{0}', space=vmem, size = 0x2800, scoped, tag = 'input window, operand 0, single buffered']
    #allocation4 [shape = 's32[1]{0}', space=sflag, size = 0x4, scoped, tag = 'scoped memory for tpu_custom_call.1']
    #allocation5 [shape = 'u8[98304]{0}', space=vmem, size = 0x18000, scoped, tag = 'input window, operand 1, single buffered']
    #allocation6 [shape = 's32[1]{0}', space=sflag, size = 0x4, scoped, tag = 'scoped memory for tpu_custom_call.1']
    #allocation7 [shape = 'u8[98304]{0}', space=vmem, size = 0x18000, scoped, tag = 'input window, operand 4, single buffered']
    %12 = vsyncpa [#allocation4], 0
    %13 = vsyncpa [#allocation6], 0
    // Predicated region
    $region2: #{tpu_custom_call.1} parent=1 // pred_check
      _
    $region3: #{tpu_custom_call.1} parent=1 // pred_check_branch
      %15 = sbr.rel (0) target = $region5
    $region4: #{tpu_custom_call.1} parent=1 // pred_region
      %s17 = ssub.s32 320, 320
      %18 = vsyncadd [#allocation4], %s17
      %s19 = sshll.u32 [#allocation3], 4
      %s20 = int_to_ptr.vmem [resolvable:$true] %s19
      %25 = dma.hbm_to_vmem [thread:$0]  %s0, 320, %s20, [#allocation4], 64, 64, 4
    $region5: #{tpu_custom_call.1} parent=1 // pred_fallthru
      _
    // Predicated region
    $region6: #{tpu_custom_call.1} parent=1 // pred_check
      _
    $region7: #{tpu_custom_call.1} parent=1 // pred_check_branch
      %27 = sbr.rel (0) target = $region9
    $region8: #{tpu_custom_call.1} parent=1 // pred_region
      %s29 = ssub.s32 3072, 3072
      %30 = vsyncadd [#allocation6], %s29
      %s31 = sshll.u32 [#allocation5], 4
      %s32 = int_to_ptr.vmem [resolvable:$true] %s31
      %37 = dma.hbm_to_vmem [thread:$0]  %s1, 3072, %s32, [#allocation6], 64, 64, 4
    $region9: #{tpu_custom_call.1} parent=1 // pred_fallthru
      _
    // Predicated region
    $region10: #{tpu_custom_call.1} parent=1 // pred_check
      _
    $region11: #{tpu_custom_call.1} parent=1 // pred_check_branch
      %39 = sbr.rel (0) target = $region13
    $region12: #{tpu_custom_call.1} parent=1 // pred_region
      _
    $region13: #{tpu_custom_call.1} parent=1 // pred_fallthru
      _
    // Predicated region
    $region14: #{tpu_custom_call.1} parent=1 // pred_check
      _
    $region15: #{tpu_custom_call.1} parent=1 // pred_check_branch
      %41 = sbr.rel (0) target = $region17
    $region16: #{tpu_custom_call.1} parent=1 // pred_region
      _
    $region17: #{tpu_custom_call.1} parent=1 // pred_fallthru
      _
    // Predicated region
    $region18: #{tpu_custom_call.1} parent=1 // pred_check
      _
    $region19: #{tpu_custom_call.1} parent=1 // pred_check_branch
      %43 = sbr.rel (0) target = $region21
    $region20: #{tpu_custom_call.1} parent=1 // pred_region
      %s45 = ssub.s32 3072, 3072
      %46 = vsyncadd [#allocation6], %s45
      %s47 = sshll.u32 [#allocation7], 4
      %s48 = int_to_ptr.vmem [resolvable:$true] %s47
      %53 = dma.hbm_to_vmem [thread:$0]  %s4, 3072, %s48, [#allocation6], 64, 64, 4
    $region21: #{tpu_custom_call.1} parent=1 // pred_fallthru
      _
    // Predicated region
    $region22: #{tpu_custom_call.1} parent=1 // pred_check
      _
    $region23: #{tpu_custom_call.1} parent=1 // pred_check_branch
      %55 = sbr.rel (0) target = $region25
    $region24: #{tpu_custom_call.1} parent=1 // pred_region
      _
    $region25: #{tpu_custom_call.1} parent=1 // pred_fallthru
      _
    // Predicated region
    $region26: #{tpu_custom_call.1} parent=1 // pred_check
      _
    $region27: #{tpu_custom_call.1} parent=1 // pred_check_branch
      %57 = sbr.rel (0) target = $region29
    $region28: #{tpu_custom_call.1} parent=1 // pred_region
      _
    $region29: #{tpu_custom_call.1} parent=1 // pred_fallthru
      _
    // Predicated region
    $region30: #{tpu_custom_call.1} parent=1 // pred_check
      _
    $region31: #{tpu_custom_call.1} parent=1 // pred_check_branch
      %59 = sbr.rel (0) target = $region33
    $region32: #{tpu_custom_call.1} parent=1 // pred_region
      %60 = dma.done [#allocation4], 320
    $region33: #{tpu_custom_call.1} parent=1 // pred_fallthru
      _
    // Predicated region
    $region34: #{tpu_custom_call.1} parent=1 // pred_check
      _
    $region35: #{tpu_custom_call.1} parent=1 // pred_check_branch
      %62 = sbr.rel (0) target = $region37
    $region36: #{tpu_custom_call.1} parent=1 // pred_region
      %63 = dma.done [#allocation6], 3072
    $region37: #{tpu_custom_call.1} parent=1 // pred_fallthru
      _
    // Predicated region
    $region38: #{tpu_custom_call.1} parent=1 // pred_check
      _
    $region39: #{tpu_custom_call.1} parent=1 // pred_check_branch
      %65 = sbr.rel (0) target = $region41
    $region40: #{tpu_custom_call.1} parent=1 // pred_region
      %66 = dma.done [#allocation6], 3072
    $region41: #{tpu_custom_call.1} parent=1 // pred_fallthru
      _
    %v68 = vld [vmem:[#allocation3] sm:$0xf]
    %v69 = vld [vmem:[#allocation3 + $0x4] sm:$0xf]
    %v70 = vld [vmem:[#allocation3 + $0x8] sm:$0xf]
    %v71 = vld [vmem:[#allocation3 + $0xc] sm:$0xf]
    %v72 = vld [vmem:[#allocation3 + $0x10] sm:$0x3]
    %v73 = vld [vmem:[#allocation5] sm:$0xf]
    %v74 = vld [vmem:[#allocation5 + $0x4] sm:$0xf]
    %v75 = vld [vmem:[#allocation5 + $0x8] sm:$0xf]
    %v76 = vld [vmem:[#allocation5 + $0xc] sm:$0xf]
    %v77 = vld [vmem:[#allocation5 + $0x10] sm:$0xf]
    %v78 = vld [vmem:[#allocation5 + $0x14] sm:$0xf]
    %v79 = vld [vmem:[#allocation5 + $0x18] sm:$0xf]
    %v80 = vld [vmem:[#allocation5 + $0x1c] sm:$0xf]
    %v81 = vld [vmem:[#allocation5 + $0x20] sm:$0xf]
    %v82 = vld [vmem:[#allocation5 + $0x24] sm:$0xf]
    %v83 = vld [vmem:[#allocation5 + $0x28] sm:$0xf]
    %v84 = vld [vmem:[#allocation5 + $0x2c] sm:$0xf]
    %v85 = vld [vmem:[#allocation5 + $0x30] sm:$0xf]
    %v86 = vld [vmem:[#allocation5 + $0x34] sm:$0xf]
    %v87 = vld [vmem:[#allocation5 + $0x38] sm:$0xf]
    %v88 = vld [vmem:[#allocation5 + $0x3c] sm:$0xf]
    %s89 = scalar_lea.vmem [#allocation5], 64
    %v90 = vld [vmem:[%s89] sm:$0xf]
    %v91 = vld [vmem:[%s89 + $0x4] sm:$0xf]
    %v92 = vld [vmem:[%s89 + $0x8] sm:$0xf]
    %v93 = vld [vmem:[%s89 + $0xc] sm:$0xf]
    %v94 = vld [vmem:[%s89 + $0x10] sm:$0xf]
    %v95 = vld [vmem:[%s89 + $0x14] sm:$0xf]
    %v96 = vld [vmem:[%s89 + $0x18] sm:$0xf]
    %v97 = vld [vmem:[%s89 + $0x1c] sm:$0xf]
    %v98 = vld [vmem:[%s89 + $0x20] sm:$0xf]
    %v99 = vld [vmem:[%s89 + $0x24] sm:$0xf]
    %v100 = vld [vmem:[%s89 + $0x28] sm:$0xf]
    %v101 = vld [vmem:[%s89 + $0x2c] sm:$0xf]
    %v102 = vld [vmem:[%s89 + $0x30] sm:$0xf]
    %v103 = vld [vmem:[%s89 + $0x34] sm:$0xf]
    %v104 = vld [vmem:[%s89 + $0x38] sm:$0xf]
    %v105 = vld [vmem:[%s89 + $0x3c] sm:$0xf]
    %v111 = vunpack.c.l.b16 %v68
    %v112 = vunpack.c.l.b16 %v69
    %v113 = vunpack.c.l.b16 %v70
    %v114 = vunpack.c.l.b16 %v71
    %v115 = vunpack.c.l.b16 %v72
    %v116 = vpack.c.b16 %v112, %v111
    %v117 = vpack.c.b16 %v114, %v113
    %v118 = vpack.c.b16 %v115, %v115
    %vm119 = vsmask.f32 7424
    %v121 = vshrl.u32 %v116, 16
    %v123 = vshll.u32 %v116, 16
    %v125 = vrot.slane %v123, 1
    %v126 = vor.u32 %v121, %v125
    %v128 = vshll.u32 %v117, 16
    %v130 = vrot.slane %v128, 1
    %v131 = vsel %vm119, %v126, %v130
    %v132 = vshrl.u32 %v117, 16
    %v134 = vor.u32 %v132, %v130
    %v136 = vshll.u32 %v118, 16
    %v138 = vrot.slane %v136, 1
    %v139 = vsel %vm119, %v134, %v138
    %v140 = vshrl.u32 %v118, 16
    %v142 = vor.u32 %v140, %v138
    %v162 = vunpack.c.l.b16 %v90
    %v163 = vunpack.c.l.b16 %v91
    %v164 = vunpack.c.l.b16 %v92
    %v165 = vunpack.c.l.b16 %v93
    %v166 = vunpack.c.l.b16 %v94
    %v167 = vunpack.c.l.b16 %v95
    %v168 = vunpack.c.l.b16 %v96
    %v169 = vunpack.c.l.b16 %v97
    %v170 = vunpack.c.l.b16 %v98
    %v171 = vunpack.c.l.b16 %v99
    %v172 = vunpack.c.l.b16 %v100
    %v173 = vunpack.c.l.b16 %v101
    %v174 = vunpack.c.l.b16 %v102
    %v175 = vunpack.c.l.b16 %v103
    %v176 = vunpack.c.l.b16 %v104
    %v177 = vunpack.c.l.b16 %v105
    %v178 = vpack.c.b16 %v163, %v162
    %v179 = vpack.c.b16 %v165, %v164
    %v180 = vpack.c.b16 %v167, %v166
    %v181 = vpack.c.b16 %v169, %v168
    %v182 = vpack.c.b16 %v171, %v170
    %v183 = vpack.c.b16 %v173, %v172
    %v184 = vpack.c.b16 %v175, %v174
    %v185 = vpack.c.b16 %v177, %v176
    %194 = vmatprep.subr.bf16.mxu0 0
    %195 = vmatpush1.bf16.msra.mxu0 %v178
    %196 = vmatprep.subr.bf16.mxu0 0
    %197 = vmatpush1.bf16.msra.mxu0 %v179
    %198 = vmatprep.subr.bf16.mxu0 0
    %199 = vmatpush1.bf16.msra.mxu0 %v180
    %200 = vmatprep.subr.bf16.mxu0 0
    %201 = vmatpush1.bf16.msra.mxu0 %v181
    %202 = vmatprep.subr.bf16.mxu0 0
    %203 = vmatpush1.bf16.msra.mxu0 %v182
    %204 = vmatprep.subr.bf16.mxu0 0
    %205 = vmatpush1.bf16.msra.mxu0 %v183
    %206 = vmatprep.subr.bf16.mxu0 0
    %207 = vmatpush1.bf16.msra.mxu0 %v184
    %208 = vmatprep.subr.bf16.mxu0 0
    %209 = vmatpush1.bf16.msra.mxu0 %v185
    %210 = vmatprep.subr.bf16.mxu0 0
    %211 = vmatpush1.bf16.msra.mxu0 0
    %212 = vmatprep.subr.bf16.mxu0 0
    %213 = vmatpush1.bf16.msra.mxu0 0
    %214 = vmatprep.subr.bf16.mxu0 0
    %215 = vmatpush1.bf16.msra.mxu0 0
    %216 = vmatprep.subr.bf16.mxu0 0
    %217 = vmatpush1.bf16.msra.mxu0 0
    %218 = vmatprep.subr.bf16.mxu0 0
    %219 = vmatpush1.bf16.msra.mxu0 0
    %220 = vmatprep.subr.bf16.mxu0 0
    %221 = vmatpush1.bf16.msra.mxu0 0
    %222 = vmatprep.subr.bf16.mxu0 0
    %223 = vmatpush1.bf16.msra.mxu0 0
    %224 = vmatprep.subr.bf16.mxu0 0
    %225 = vmatpush1.bf16.msra.mxu0 0
    %226 = vmatprep.mubr.bf16.mxu0 0
    %227 = vmatmul.mubr.bf16.gmra.mrb[0].mxu0 %v131
    %v228 = vpop.f32.mrb[0].mxu0
    %v229 = vadd.f32 0.0, %v228
    %v230 = vpop.f32.mrb[0].mxu0
    %v231 = vpop.f32.mrb[0].mxu0
    %v232 = vadd.f32 0.0, %v231
    %v233 = vpop.f32.mrb[0].mxu0
    %234 = vmatprep.mubr.bf16.mxu0 0
    %235 = vmatmul.mubr.bf16.gmra.mrb[0].mxu0 %v139
    %v236 = vpop.f32.mrb[0].mxu0
    %v237 = vadd.f32 0.0, %v236
    %v238 = vpop.f32.mrb[0].mxu0
    %v239 = vpop.f32.mrb[0].mxu0
    %v240 = vadd.f32 0.0, %v239
    %v241 = vpop.f32.mrb[0].mxu0
    %242 = vmatprep.mubr.bf16.mxu0 0
    %243 = vmatmul.mubr.bf16.gmra.mrb[0].mxu0 %v142
    %v244 = vpop.f32.mrb[0].mxu0
    %v245 = vadd.f32 0.0, %v244
    %v246 = vpop.f32.mrb[0].mxu0
    %v247 = vpop.f32.mrb[0].mxu0
    %v248 = vpop.f32.mrb[0].mxu0
    %249 = vdwg.mxu0
    %s250 = scalar_lea.vmem [#allocation5], 128
    %v251 = vld [vmem:[%s250] sm:$0xf]
    %v252 = vld [vmem:[%s250 + $0x4] sm:$0xf]
    %v253 = vld [vmem:[%s250 + $0x8] sm:$0xf]
    %v254 = vld [vmem:[%s250 + $0xc] sm:$0xf]
    %v255 = vld [vmem:[%s250 + $0x10] sm:$0xf]
    %v256 = vld [vmem:[%s250 + $0x14] sm:$0xf]
    %v257 = vld [vmem:[%s250 + $0x18] sm:$0xf]
    %v258 = vld [vmem:[%s250 + $0x1c] sm:$0xf]
    %v259 = vld [vmem:[%s250 + $0x20] sm:$0xf]
    %v260 = vld [vmem:[%s250 + $0x24] sm:$0xf]
    %v261 = vld [vmem:[%s250 + $0x28] sm:$0xf]
    %v262 = vld [vmem:[%s250 + $0x2c] sm:$0xf]
    %v263 = vld [vmem:[%s250 + $0x30] sm:$0xf]
    %v264 = vld [vmem:[%s250 + $0x34] sm:$0xf]
    %v265 = vld [vmem:[%s250 + $0x38] sm:$0xf]
    %v266 = vld [vmem:[%s250 + $0x3c] sm:$0xf]
    %vm267 = vcmask 1046528
    %v268 = vrot.slane %v116, 1
    %v269 = vrot.slane %v117, 1
    %v270 = vsel %vm267, %v268, %v269
    %v271 = vrot.slane %v118, 1
    %v272 = vsel %vm267, %v269, %v271
    %v292 = vunpack.c.l.b16 %v251
    %v293 = vunpack.c.l.b16 %v252
    %v294 = vunpack.c.l.b16 %v253
    %v295 = vunpack.c.l.b16 %v254
    %v296 = vunpack.c.l.b16 %v255
    %v297 = vunpack.c.l.b16 %v256
    %v298 = vunpack.c.l.b16 %v257
    %v299 = vunpack.c.l.b16 %v258
    %v300 = vunpack.c.l.b16 %v259
    %v301 = vunpack.c.l.b16 %v260
    %v302 = vunpack.c.l.b16 %v261
    %v303 = vunpack.c.l.b16 %v262
    %v304 = vunpack.c.l.b16 %v263
    %v305 = vunpack.c.l.b16 %v264
    %v306 = vunpack.c.l.b16 %v265
    %v307 = vunpack.c.l.b16 %v266
    %v308 = vpack.c.b16 %v293, %v292
    %v309 = vpack.c.b16 %v295, %v294
    %v310 = vpack.c.b16 %v297, %v296
    %v311 = vpack.c.b16 %v299, %v298
    %v312 = vpack.c.b16 %v301, %v300
    %v313 = vpack.c.b16 %v303, %v302
    %v314 = vpack.c.b16 %v305, %v304
    %v315 = vpack.c.b16 %v307, %v306
    %324 = vmatprep.subr.bf16.mxu0 0
    %325 = vmatpush1.bf16.msra.mxu0 %v308
    %326 = vmatprep.subr.bf16.mxu0 0
    %327 = vmatpush1.bf16.msra.mxu0 %v309
    %328 = vmatprep.subr.bf16.mxu0 0
    %329 = vmatpush1.bf16.msra.mxu0 %v310
    %330 = vmatprep.subr.bf16.mxu0 0
    %331 = vmatpush1.bf16.msra.mxu0 %v311
    %332 = vmatprep.subr.bf16.mxu0 0
    %333 = vmatpush1.bf16.msra.mxu0 %v312
    %334 = vmatprep.subr.bf16.mxu0 0
    %335 = vmatpush1.bf16.msra.mxu0 %v313
    %336 = vmatprep.subr.bf16.mxu0 0
    %337 = vmatpush1.bf16.msra.mxu0 %v314
    %338 = vmatprep.subr.bf16.mxu0 0
    %339 = vmatpush1.bf16.msra.mxu0 %v315
    %340 = vmatprep.subr.bf16.mxu0 0
    %341 = vmatpush1.bf16.msra.mxu0 0
    %342 = vmatprep.subr.bf16.mxu0 0
    %343 = vmatpush1.bf16.msra.mxu0 0
    %344 = vmatprep.subr.bf16.mxu0 0
    %345 = vmatpush1.bf16.msra.mxu0 0
    %346 = vmatprep.subr.bf16.mxu0 0
    %347 = vmatpush1.bf16.msra.mxu0 0
    %348 = vmatprep.subr.bf16.mxu0 0
    %349 = vmatpush1.bf16.msra.mxu0 0
    %350 = vmatprep.subr.bf16.mxu0 0
    %351 = vmatpush1.bf16.msra.mxu0 0
    %352 = vmatprep.subr.bf16.mxu0 0
    %353 = vmatpush1.bf16.msra.mxu0 0
    %354 = vmatprep.subr.bf16.mxu0 0
    %355 = vmatpush1.bf16.msra.mxu0 0
    %356 = vmatprep.mubr.bf16.mxu0 0
    %357 = vmatmul.mubr.bf16.gmra.mrb[0].mxu0 %v270
    %v358 = vpop.f32.mrb[0].mxu0
    %v359 = vadd.f32 0.0, %v358
    %v360 = vpop.f32.mrb[0].mxu0
    %v361 = vpop.f32.mrb[0].mxu0
    %v362 = vadd.f32 0.0, %v361
    %v363 = vpop.f32.mrb[0].mxu0
    %364 = vmatprep.mubr.bf16.mxu0 0
    %365 = vmatmul.mubr.bf16.gmra.mrb[0].mxu0 %v272
    %v366 = vpop.f32.mrb[0].mxu0
    %v367 = vadd.f32 0.0, %v366
    %v368 = vpop.f32.mrb[0].mxu0
    %v369 = vpop.f32.mrb[0].mxu0
    %v370 = vadd.f32 0.0, %v369
    %v371 = vpop.f32.mrb[0].mxu0
    %372 = vmatprep.mubr.bf16.mxu0 0
    %373 = vmatmul.mubr.bf16.gmra.mrb[0].mxu0 %v271
    %v374 = vpop.f32.mrb[0].mxu0
    %v375 = vadd.f32 0.0, %v374
    %v376 = vpop.f32.mrb[0].mxu0
    %v377 = vpop.f32.mrb[0].mxu0
    %v378 = vpop.f32.mrb[0].mxu0
    %379 = vdwg.mxu0
    %v399 = vunpack.c.l.b16 %v73
    %v400 = vunpack.c.l.b16 %v74
    %v401 = vunpack.c.l.b16 %v75
    %v402 = vunpack.c.l.b16 %v76
    %v403 = vunpack.c.l.b16 %v77
    %v404 = vunpack.c.l.b16 %v78
    %v405 = vunpack.c.l.b16 %v79
    %v406 = vunpack.c.l.b16 %v80
    %v407 = vunpack.c.l.b16 %v81
    %v408 = vunpack.c.l.b16 %v82
    %v409 = vunpack.c.l.b16 %v83
    %v410 = vunpack.c.l.b16 %v84
    %v411 = vunpack.c.l.b16 %v85
    %v412 = vunpack.c.l.b16 %v86
    %v413 = vunpack.c.l.b16 %v87
    %v414 = vunpack.c.l.b16 %v88
    %v415 = vpack.c.b16 %v400, %v399
    %v416 = vpack.c.b16 %v402, %v401
    %v417 = vpack.c.b16 %v404, %v403
    %v418 = vpack.c.b16 %v406, %v405
    %v419 = vpack.c.b16 %v408, %v407
    %v420 = vpack.c.b16 %v410, %v409
    %v421 = vpack.c.b16 %v412, %v411
    %v422 = vpack.c.b16 %v414, %v413
    %431 = vmatprep.subr.bf16.mxu0 0
    %432 = vmatpush1.bf16.msra.mxu0 %v415
    %433 = vmatprep.subr.bf16.mxu0 0
    %434 = vmatpush1.bf16.msra.mxu0 %v416
    %435 = vmatprep.subr.bf16.mxu0 0
    %436 = vmatpush1.bf16.msra.mxu0 %v417
    %437 = vmatprep.subr.bf16.mxu0 0
    %438 = vmatpush1.bf16.msra.mxu0 %v418
    %439 = vmatprep.subr.bf16.mxu0 0
    %440 = vmatpush1.bf16.msra.mxu0 %v419
    %441 = vmatprep.subr.bf16.mxu0 0
    %442 = vmatpush1.bf16.msra.mxu0 %v420
    %443 = vmatprep.subr.bf16.mxu0 0
    %444 = vmatpush1.bf16.msra.mxu0 %v421
    %445 = vmatprep.subr.bf16.mxu0 0
    %446 = vmatpush1.bf16.msra.mxu0 %v422
    %447 = vmatprep.subr.bf16.mxu0 0
    %448 = vmatpush1.bf16.msra.mxu0 0
    %449 = vmatprep.subr.bf16.mxu0 0
    %450 = vmatpush1.bf16.msra.mxu0 0
    %451 = vmatprep.subr.bf16.mxu0 0
    %452 = vmatpush1.bf16.msra.mxu0 0
    %453 = vmatprep.subr.bf16.mxu0 0
    %454 = vmatpush1.bf16.msra.mxu0 0
    %455 = vmatprep.subr.bf16.mxu0 0
    %456 = vmatpush1.bf16.msra.mxu0 0
    %457 = vmatprep.subr.bf16.mxu0 0
    %458 = vmatpush1.bf16.msra.mxu0 0
    %459 = vmatprep.subr.bf16.mxu0 0
    %460 = vmatpush1.bf16.msra.mxu0 0
    %461 = vmatprep.subr.bf16.mxu0 0
    %462 = vmatpush1.bf16.msra.mxu0 0
    %463 = vmatprep.mubr.bf16.mxu0 0
    %464 = vmatmul.mubr.bf16.gmra.mrb[0].mxu0 %v116
    %v465 = vpop.f32.mrb[0].mxu0
    %v466 = vadd.f32 %v229, %v465
    %v467 = vpop.f32.mrb[0].mxu0
    %v468 = vpop.f32.mrb[0].mxu0
    %v469 = vadd.f32 %v232, %v468
    %v470 = vpop.f32.mrb[0].mxu0
    %471 = vmatprep.mubr.bf16.mxu0 0
    %472 = vmatmul.mubr.bf16.gmra.mrb[0].mxu0 %v117
    %v473 = vpop.f32.mrb[0].mxu0
    %v474 = vadd.f32 %v237, %v473
    %v475 = vpop.f32.mrb[0].mxu0
    %v476 = vpop.f32.mrb[0].mxu0
    %v477 = vadd.f32 %v240, %v476
    %v478 = vpop.f32.mrb[0].mxu0
    %479 = vmatprep.mubr.bf16.mxu0 0
    %480 = vmatmul.mubr.bf16.gmra.mrb[0].mxu0 %v118
    %v481 = vpop.f32.mrb[0].mxu0
    %v482 = vadd.f32 %v245, %v481
    %v483 = vpop.f32.mrb[0].mxu0
    %v484 = vpop.f32.mrb[0].mxu0
    %v485 = vpop.f32.mrb[0].mxu0
    %486 = vdwg.mxu0
    %v487 = vadd.f32 %v466, %v359
    %v488 = vadd.f32 %v469, %v362
    %v489 = vadd.f32 %v474, %v367
    %v490 = vadd.f32 %v477, %v370
    %v491 = vadd.f32 %v482, %v375
    %v492 = vld [vmem:[%s2] sm:$0x1]
    %v494 = vlaneseq
    %v495 = vshrl.u32 %v494, 7
    %v496 = vsub.s32 0, %v495
    %v497 = vrot.slane %v492, %v496
    %v499 = vmul.f32 %v487, %v497
    %v500 = vmul.f32 %v488, %v497
    %v501 = vmul.f32 %v489, %v497
    %v502 = vmul.f32 %v490, %v497
    %v503 = vmul.f32 %v491, %v497
    %v504 = vld [vmem:[%s3] sm:$0x1]
    %v506 = vlaneseq
    %v507 = vshrl.u32 %v506, 7
    %v508 = vsub.s32 0, %v507
    %v509 = vrot.slane %v504, %v508
    %v511 = vadd.f32 %v499, %v509
    %v512 = vadd.f32 %v500, %v509
    %v513 = vadd.f32 %v501, %v509
    %v514 = vadd.f32 %v502, %v509
    %v515 = vadd.f32 %v503, %v509
    %v516 = vmax.f32 %v511, 0.0
    %v517 = vmax.f32 %v512, 0.0
    %v518 = vmax.f32 %v513, 0.0
    %v519 = vmax.f32 %v514, 0.0
    %v520 = vmax.f32 %v515, 0.0
    %v521 = vpack.c.bf16 %v517, %v516
    %v522 = vpack.c.bf16 %v519, %v518
    %v523 = vpack.c.bf16 %v520, %v520
    %v527 = vunpack.c.l.b16 %v521
    %v528 = vunpack.c.h.b16 %v521
    %v529 = vunpack.c.l.b16 %v522
    %v530 = vunpack.c.h.b16 %v522
    %v531 = vunpack.c.l.b16 %v523
    %v532 = vpack.c.b16 %v527, %v527
    %v533 = vpack.c.b16 %v528, %v528
    %v534 = vpack.c.b16 %v529, %v529
    %v535 = vpack.c.b16 %v530, %v530
    %v536 = vpack.c.b16 %v531, %v531
    %vm537 = vsmask.f32 256
    %vm538 = vsmask.f32 4368
    %vm539 = vmor %vm537, %vm538
    %v541 = vshrl.u32 %v532, 16
    %v543 = vrot.slane %v541, 7
    %v544 = vshll.u32 %v532, 16
    %v546 = vor.u32 %v543, %v544
    %v547 = vrot.slane %v543, 4
    %v549 = vshrl.u32 %v533, 16
    %v551 = vrot.slane %v549, 7
    %v552 = vshll.u32 %v533, 16
    %v554 = vor.u32 %v551, %v552
    %v555 = vsel %vm539, %v547, %v554
    %v556 = vrot.slane %v551, 4
    %v558 = vshrl.u32 %v534, 16
    %v560 = vrot.slane %v558, 7
    %v561 = vshll.u32 %v534, 16
    %v563 = vor.u32 %v560, %v561
    %v564 = vsel %vm539, %v556, %v563
    %v565 = vrot.slane %v560, 4
    %v567 = vshrl.u32 %v535, 16
    %v569 = vrot.slane %v567, 7
    %v570 = vshll.u32 %v535, 16
    %v572 = vor.u32 %v569, %v570
    %v573 = vsel %vm539, %v565, %v572
    %v574 = vrot.slane %v569, 4
    %v576 = vshrl.u32 %v536, 16
    %v578 = vrot.slane %v576, 7
    %v579 = vshll.u32 %v536, 16
    %v581 = vor.u32 %v578, %v579
    %v582 = vsel %vm539, %v574, %v581
    %vm588 = vcmask 1043456
    %vm589 = vsmask.f32 7938
    %vm590 = vmand %vm588, %vm589
    %v591 = vld [vmem:[#allocation2] sm:$0xf]
    %v592 = vsel %vm590, %v546, %v591
    %593 = vst [vmem:[#allocation2] sm:$0xf] %v592
    %594 = vst [vmem:[#allocation2 + $0x4] sm:$0xf] %v555
    %595 = vst [vmem:[#allocation2 + $0x8] sm:$0xf] %v564
    %596 = vst [vmem:[#allocation2 + $0xc] sm:$0xf] %v573
    %vm597 = vcmask 1041408
    %vm598 = vsmask.f32 1280
    %vm599 = vmand %vm597, %vm598
    %v600 = vld [vmem:[#allocation2 + $0x10] sm:$0x3]
    %v601 = vsel %vm599, %v582, %v600
    %602 = vst [vmem:[#allocation2 + $0x10] sm:$0x3] %v601
    %vm603 = vcmask 1040384
    %vm604 = vmand %vm603, %vm537
    %v605 = vld [vmem:[#allocation2] sm:$0x1]
    %v606 = vsel %vm604, 0, %v605
    %607 = vst [vmem:[#allocation2] sm:$0x1] %v606
    %vm608 = vmand %vm603, %vm589
    %v609 = vld [vmem:[#allocation2 + $0x8] sm:$0x1]
    %v610 = vsel %vm608, 0, %v609
    %611 = vst [vmem:[#allocation2 + $0x8] sm:$0x1] %v610
    %vm612 = vcmask 1041409
    %vm613 = vmand %vm612, %vm598
    %v614 = vld [vmem:[#allocation2 + $0x8] sm:$0x2]
    %v615 = vsel %vm613, 0, %v614
    %616 = vst [vmem:[#allocation2 + $0x8] sm:$0x2] %v615
    %vm617 = vsmask.f32 7942
    %vm618 = vmand %vm612, %vm617
    %v619 = vld [vmem:[#allocation2 + $0x10] sm:$0x2]
    %v620 = vsel %vm618, 0, %v619
    %621 = vst [vmem:[#allocation2 + $0x10] sm:$0x2] %v620
    %v622 = vld [vmem:[#allocation2] sm:$0xf]
    %v623 = vld [vmem:[#allocation2 + $0x4] sm:$0xf]
    %v624 = vld [vmem:[#allocation2 + $0x8] sm:$0xf]
    %v625 = vld [vmem:[#allocation2 + $0xc] sm:$0xf]
    %v626 = vld [vmem:[#allocation2 + $0x10] sm:$0x3]
    %v627 = vld [vmem:[#allocation7] sm:$0xf]
    %v628 = vld [vmem:[#allocation7 + $0x4] sm:$0xf]
    %v629 = vld [vmem:[#allocation7 + $0x8] sm:$0xf]
    %v630 = vld [vmem:[#allocation7 + $0xc] sm:$0xf]
    %v631 = vld [vmem:[#allocation7 + $0x10] sm:$0xf]
    %v632 = vld [vmem:[#allocation7 + $0x14] sm:$0xf]
    %v633 = vld [vmem:[#allocation7 + $0x18] sm:$0xf]
    %v634 = vld [vmem:[#allocation7 + $0x1c] sm:$0xf]
    %v635 = vld [vmem:[#allocation7 + $0x20] sm:$0xf]
    %v636 = vld [vmem:[#allocation7 + $0x24] sm:$0xf]
    %v637 = vld [vmem:[#allocation7 + $0x28] sm:$0xf]
    %v638 = vld [vmem:[#allocation7 + $0x2c] sm:$0xf]
    %v639 = vld [vmem:[#allocation7 + $0x30] sm:$0xf]
    %v640 = vld [vmem:[#allocation7 + $0x34] sm:$0xf]
    %v641 = vld [vmem:[#allocation7 + $0x38] sm:$0xf]
    %v642 = vld [vmem:[#allocation7 + $0x3c] sm:$0xf]
    %s643 = scalar_lea.vmem [#allocation7], 64
    %v644 = vld [vmem:[%s643] sm:$0xf]
    %v645 = vld [vmem:[%s643 + $0x4] sm:$0xf]
    %v646 = vld [vmem:[%s643 + $0x8] sm:$0xf]
    %v647 = vld [vmem:[%s643 + $0xc] sm:$0xf]
    %v648 = vld [vmem:[%s643 + $0x10] sm:$0xf]
    %v649 = vld [vmem:[%s643 + $0x14] sm:$0xf]
    %v650 = vld [vmem:[%s643 + $0x18] sm:$0xf]
    %v651 = vld [vmem:[%s643 + $0x1c] sm:$0xf]
    %v652 = vld [vmem:[%s643 + $0x20] sm:$0xf]
    %v653 = vld [vmem:[%s643 + $0x24] sm:$0xf]
    %v654 = vld [vmem:[%s643 + $0x28] sm:$0xf]
    %v655 = vld [vmem:[%s643 + $0x2c] sm:$0xf]
    %v656 = vld [vmem:[%s643 + $0x30] sm:$0xf]
    %v657 = vld [vmem:[%s643 + $0x34] sm:$0xf]
    %v658 = vld [vmem:[%s643 + $0x38] sm:$0xf]
    %v659 = vld [vmem:[%s643 + $0x3c] sm:$0xf]
    %v665 = vunpack.c.l.b16 %v622
    %v666 = vunpack.c.l.b16 %v623
    %v667 = vunpack.c.l.b16 %v624
    %v668 = vunpack.c.l.b16 %v625
    %v669 = vunpack.c.l.b16 %v626
    %v670 = vpack.c.b16 %v666, %v665
    %v671 = vpack.c.b16 %v668, %v667
    %v672 = vpack.c.b16 %v669, %v669
    %v674 = vshrl.u32 %v670, 16
    %v676 = vshll.u32 %v670, 16
    %v678 = vrot.slane %v676, 1
    %v679 = vor.u32 %v674, %v678
    %v681 = vshll.u32 %v671, 16
    %v683 = vrot.slane %v681, 1
    %v684 = vsel %vm119, %v679, %v683
    %v685 = vshrl.u32 %v671, 16
    %v687 = vor.u32 %v685, %v683
    %v689 = vshll.u32 %v672, 16
    %v691 = vrot.slane %v689, 1
    %v692 = vsel %vm119, %v687, %v691
    %v693 = vshrl.u32 %v672, 16
    %v695 = vor.u32 %v693, %v691
    %v715 = vunpack.c.l.b16 %v644
    %v716 = vunpack.c.l.b16 %v645
    %v717 = vunpack.c.l.b16 %v646
    %v718 = vunpack.c.l.b16 %v647
    %v719 = vunpack.c.l.b16 %v648
    %v720 = vunpack.c.l.b16 %v649
    %v721 = vunpack.c.l.b16 %v650
    %v722 = vunpack.c.l.b16 %v651
    %v723 = vunpack.c.l.b16 %v652
    %v724 = vunpack.c.l.b16 %v653
    %v725 = vunpack.c.l.b16 %v654
    %v726 = vunpack.c.l.b16 %v655
    %v727 = vunpack.c.l.b16 %v656
    %v728 = vunpack.c.l.b16 %v657
    %v729 = vunpack.c.l.b16 %v658
    %v730 = vunpack.c.l.b16 %v659
    %v731 = vpack.c.b16 %v716, %v715
    %v732 = vpack.c.b16 %v718, %v717
    %v733 = vpack.c.b16 %v720, %v719
    %v734 = vpack.c.b16 %v722, %v721
    %v735 = vpack.c.b16 %v724, %v723
    %v736 = vpack.c.b16 %v726, %v725
    %v737 = vpack.c.b16 %v728, %v727
    %v738 = vpack.c.b16 %v730, %v729
    %747 = vmatprep.subr.bf16.mxu0 0
    %748 = vmatpush1.bf16.msra.mxu0 %v731
    %749 = vmatprep.subr.bf16.mxu0 0
    %750 = vmatpush1.bf16.msra.mxu0 %v732
    %751 = vmatprep.subr.bf16.mxu0 0
    %752 = vmatpush1.bf16.msra.mxu0 %v733
    %753 = vmatprep.subr.bf16.mxu0 0
    %754 = vmatpush1.bf16.msra.mxu0 %v734
    %755 = vmatprep.subr.bf16.mxu0 0
    %756 = vmatpush1.bf16.msra.mxu0 %v735
    %757 = vmatprep.subr.bf16.mxu0 0
    %758 = vmatpush1.bf16.msra.mxu0 %v736
    %759 = vmatprep.subr.bf16.mxu0 0
    %760 = vmatpush1.bf16.msra.mxu0 %v737
    %761 = vmatprep.subr.bf16.mxu0 0
    %762 = vmatpush1.bf16.msra.mxu0 %v738
    %763 = vmatprep.subr.bf16.mxu0 0
    %764 = vmatpush1.bf16.msra.mxu0 0
    %765 = vmatprep.subr.bf16.mxu0 0
    %766 = vmatpush1.bf16.msra.mxu0 0
    %767 = vmatprep.subr.bf16.mxu0 0
    %768 = vmatpush1.bf16.msra.mxu0 0
    %769 = vmatprep.subr.bf16.mxu0 0
    %770 = vmatpush1.bf16.msra.mxu0 0
    %771 = vmatprep.subr.bf16.mxu0 0
    %772 = vmatpush1.bf16.msra.mxu0 0
    %773 = vmatprep.subr.bf16.mxu0 0
    %774 = vmatpush1.bf16.msra.mxu0 0
    %775 = vmatprep.subr.bf16.mxu0 0
    %776 = vmatpush1.bf16.msra.mxu0 0
    %777 = vmatprep.subr.bf16.mxu0 0
    %778 = vmatpush1.bf16.msra.mxu0 0
    %779 = vmatprep.mubr.bf16.mxu0 0
    %780 = vmatmul.mubr.bf16.gmra.mrb[0].mxu0 %v684
    %v781 = vpop.f32.mrb[0].mxu0
    %v782 = vadd.f32 0.0, %v781
    %v783 = vpop.f32.mrb[0].mxu0
    %v784 = vpop.f32.mrb[0].mxu0
    %v785 = vadd.f32 0.0, %v784
    %v786 = vpop.f32.mrb[0].mxu0
    %787 = vmatprep.mubr.bf16.mxu0 0
    %788 = vmatmul.mubr.bf16.gmra.mrb[0].mxu0 %v692
    %v789 = vpop.f32.mrb[0].mxu0
    %v790 = vadd.f32 0.0, %v789
    %v791 = vpop.f32.mrb[0].mxu0
    %v792 = vpop.f32.mrb[0].mxu0
    %v793 = vadd.f32 0.0, %v792
    %v794 = vpop.f32.mrb[0].mxu0
    %795 = vmatprep.mubr.bf16.mxu0 0
    %796 = vmatmul.mubr.bf16.gmra.mrb[0].mxu0 %v695
    %v797 = vpop.f32.mrb[0].mxu0
    %v798 = vadd.f32 0.0, %v797
    %v799 = vpop.f32.mrb[0].mxu0
    %v800 = vpop.f32.mrb[0].mxu0
    %v801 = vpop.f32.mrb[0].mxu0
    %802 = vdwg.mxu0
    %s803 = scalar_lea.vmem [#allocation7], 128
    %v804 = vld [vmem:[%s803] sm:$0xf]
    %v805 = vld [vmem:[%s803 + $0x4] sm:$0xf]
    %v806 = vld [vmem:[%s803 + $0x8] sm:$0xf]
    %v807 = vld [vmem:[%s803 + $0xc] sm:$0xf]
    %v808 = vld [vmem:[%s803 + $0x10] sm:$0xf]
    %v809 = vld [vmem:[%s803 + $0x14] sm:$0xf]
    %v810 = vld [vmem:[%s803 + $0x18] sm:$0xf]
    %v811 = vld [vmem:[%s803 + $0x1c] sm:$0xf]
    %v812 = vld [vmem:[%s803 + $0x20] sm:$0xf]
    %v813 = vld [vmem:[%s803 + $0x24] sm:$0xf]
    %v814 = vld [vmem:[%s803 + $0x28] sm:$0xf]
    %v815 = vld [vmem:[%s803 + $0x2c] sm:$0xf]
    %v816 = vld [vmem:[%s803 + $0x30] sm:$0xf]
    %v817 = vld [vmem:[%s803 + $0x34] sm:$0xf]
    %v818 = vld [vmem:[%s803 + $0x38] sm:$0xf]
    %v819 = vld [vmem:[%s803 + $0x3c] sm:$0xf]
    %v820 = vrot.slane %v670, 1
    %v821 = vrot.slane %v671, 1
    %v822 = vsel %vm267, %v820, %v821
    %v823 = vrot.slane %v672, 1
    %v824 = vsel %vm267, %v821, %v823
    %v844 = vunpack.c.l.b16 %v804
    %v845 = vunpack.c.l.b16 %v805
    %v846 = vunpack.c.l.b16 %v806
    %v847 = vunpack.c.l.b16 %v807
    %v848 = vunpack.c.l.b16 %v808
    %v849 = vunpack.c.l.b16 %v809
    %v850 = vunpack.c.l.b16 %v810
    %v851 = vunpack.c.l.b16 %v811
    %v852 = vunpack.c.l.b16 %v812
    %v853 = vunpack.c.l.b16 %v813
    %v854 = vunpack.c.l.b16 %v814
    %v855 = vunpack.c.l.b16 %v815
    %v856 = vunpack.c.l.b16 %v816
    %v857 = vunpack.c.l.b16 %v817
    %v858 = vunpack.c.l.b16 %v818
    %v859 = vunpack.c.l.b16 %v819
    %v860 = vpack.c.b16 %v845, %v844
    %v861 = vpack.c.b16 %v847, %v846
    %v862 = vpack.c.b16 %v849, %v848
    %v863 = vpack.c.b16 %v851, %v850
    %v864 = vpack.c.b16 %v853, %v852
    %v865 = vpack.c.b16 %v855, %v854
    %v866 = vpack.c.b16 %v857, %v856
    %v867 = vpack.c.b16 %v859, %v858
    %876 = vmatprep.subr.bf16.mxu0 0
    %877 = vmatpush1.bf16.msra.mxu0 %v860
    %878 = vmatprep.subr.bf16.mxu0 0
    %879 = vmatpush1.bf16.msra.mxu0 %v861
    %880 = vmatprep.subr.bf16.mxu0 0
    %881 = vmatpush1.bf16.msra.mxu0 %v862
    %882 = vmatprep.subr.bf16.mxu0 0
    %883 = vmatpush1.bf16.msra.mxu0 %v863
    %884 = vmatprep.subr.bf16.mxu0 0
    %885 = vmatpush1.bf16.msra.mxu0 %v864
    %886 = vmatprep.subr.bf16.mxu0 0
    %887 = vmatpush1.bf16.msra.mxu0 %v865
    %888 = vmatprep.subr.bf16.mxu0 0
    %889 = vmatpush1.bf16.msra.mxu0 %v866
    %890 = vmatprep.subr.bf16.mxu0 0
    %891 = vmatpush1.bf16.msra.mxu0 %v867
    %892 = vmatprep.subr.bf16.mxu0 0
    %893 = vmatpush1.bf16.msra.mxu0 0
    %894 = vmatprep.subr.bf16.mxu0 0
    %895 = vmatpush1.bf16.msra.mxu0 0
    %896 = vmatprep.subr.bf16.mxu0 0
    %897 = vmatpush1.bf16.msra.mxu0 0
    %898 = vmatprep.subr.bf16.mxu0 0
    %899 = vmatpush1.bf16.msra.mxu0 0
    %900 = vmatprep.subr.bf16.mxu0 0
    %901 = vmatpush1.bf16.msra.mxu0 0
    %902 = vmatprep.subr.bf16.mxu0 0
    %903 = vmatpush1.bf16.msra.mxu0 0
    %904 = vmatprep.subr.bf16.mxu0 0
    %905 = vmatpush1.bf16.msra.mxu0 0
    %906 = vmatprep.subr.bf16.mxu0 0
    %907 = vmatpush1.bf16.msra.mxu0 0
    %908 = vmatprep.mubr.bf16.mxu0 0
    %909 = vmatmul.mubr.bf16.gmra.mrb[0].mxu0 %v822
    %v910 = vpop.f32.mrb[0].mxu0
    %v911 = vadd.f32 0.0, %v910
    %v912 = vpop.f32.mrb[0].mxu0
    %v913 = vpop.f32.mrb[0].mxu0
    %v914 = vadd.f32 0.0, %v913
    %v915 = vpop.f32.mrb[0].mxu0
    %916 = vmatprep.mubr.bf16.mxu0 0
    %917 = vmatmul.mubr.bf16.gmra.mrb[0].mxu0 %v824
    %v918 = vpop.f32.mrb[0].mxu0
    %v919 = vadd.f32 0.0, %v918
    %v920 = vpop.f32.mrb[0].mxu0
    %v921 = vpop.f32.mrb[0].mxu0
    %v922 = vadd.f32 0.0, %v921
    %v923 = vpop.f32.mrb[0].mxu0
    %924 = vmatprep.mubr.bf16.mxu0 0
    %925 = vmatmul.mubr.bf16.gmra.mrb[0].mxu0 %v823
    %v926 = vpop.f32.mrb[0].mxu0
    %v927 = vadd.f32 0.0, %v926
    %v928 = vpop.f32.mrb[0].mxu0
    %v929 = vpop.f32.mrb[0].mxu0
    %v930 = vpop.f32.mrb[0].mxu0
    %931 = vdwg.mxu0
    %v951 = vunpack.c.l.b16 %v627
    %v952 = vunpack.c.l.b16 %v628
    %v953 = vunpack.c.l.b16 %v629
    %v954 = vunpack.c.l.b16 %v630
    %v955 = vunpack.c.l.b16 %v631
    %v956 = vunpack.c.l.b16 %v632
    %v957 = vunpack.c.l.b16 %v633
    %v958 = vunpack.c.l.b16 %v634
    %v959 = vunpack.c.l.b16 %v635
    %v960 = vunpack.c.l.b16 %v636
    %v961 = vunpack.c.l.b16 %v637
    %v962 = vunpack.c.l.b16 %v638
    %v963 = vunpack.c.l.b16 %v639
    %v964 = vunpack.c.l.b16 %v640
    %v965 = vunpack.c.l.b16 %v641
    %v966 = vunpack.c.l.b16 %v642
    %v967 = vpack.c.b16 %v952, %v951
    %v968 = vpack.c.b16 %v954, %v953
    %v969 = vpack.c.b16 %v956, %v955
    %v970 = vpack.c.b16 %v958, %v957
    %v971 = vpack.c.b16 %v960, %v959
    %v972 = vpack.c.b16 %v962, %v961
    %v973 = vpack.c.b16 %v964, %v963
    %v974 = vpack.c.b16 %v966, %v965
    %983 = vmatprep.subr.bf16.mxu0 0
    %984 = vmatpush1.bf16.msra.mxu0 %v967
    %985 = vmatprep.subr.bf16.mxu0 0
    %986 = vmatpush1.bf16.msra.mxu0 %v968
    %987 = vmatprep.subr.bf16.mxu0 0
    %988 = vmatpush1.bf16.msra.mxu0 %v969
    %989 = vmatprep.subr.bf16.mxu0 0
    %990 = vmatpush1.bf16.msra.mxu0 %v970
    %991 = vmatprep.subr.bf16.mxu0 0
    %992 = vmatpush1.bf16.msra.mxu0 %v971
    %993 = vmatprep.subr.bf16.mxu0 0
    %994 = vmatpush1.bf16.msra.mxu0 %v972
    %995 = vmatprep.subr.bf16.mxu0 0
    %996 = vmatpush1.bf16.msra.mxu0 %v973
    %997 = vmatprep.subr.bf16.mxu0 0
    %998 = vmatpush1.bf16.msra.mxu0 %v974
    %999 = vmatprep.subr.bf16.mxu0 0
    %1000 = vmatpush1.bf16.msra.mxu0 0
    %1001 = vmatprep.subr.bf16.mxu0 0
    %1002 = vmatpush1.bf16.msra.mxu0 0
    %1003 = vmatprep.subr.bf16.mxu0 0
    %1004 = vmatpush1.bf16.msra.mxu0 0
    %1005 = vmatprep.subr.bf16.mxu0 0
    %1006 = vmatpush1.bf16.msra.mxu0 0
    %1007 = vmatprep.subr.bf16.mxu0 0
    %1008 = vmatpush1.bf16.msra.mxu0 0
    %1009 = vmatprep.subr.bf16.mxu0 0
    %1010 = vmatpush1.bf16.msra.mxu0 0
    %1011 = vmatprep.subr.bf16.mxu0 0
    %1012 = vmatpush1.bf16.msra.mxu0 0
    %1013 = vmatprep.subr.bf16.mxu0 0
    %1014 = vmatpush1.bf16.msra.mxu0 0
    %1015 = vmatprep.mubr.bf16.mxu0 0
    %1016 = vmatmul.mubr.bf16.gmra.mrb[0].mxu0 %v670
    %v1017 = vpop.f32.mrb[0].mxu0
    %v1018 = vadd.f32 %v782, %v1017
    %v1019 = vpop.f32.mrb[0].mxu0
    %v1020 = vpop.f32.mrb[0].mxu0
    %v1021 = vadd.f32 %v785, %v1020
    %v1022 = vpop.f32.mrb[0].mxu0
    %1023 = vmatprep.mubr.bf16.mxu0 0
    %1024 = vmatmul.mubr.bf16.gmra.mrb[0].mxu0 %v671
    %v1025 = vpop.f32.mrb[0].mxu0
    %v1026 = vadd.f32 %v790, %v1025
    %v1027 = vpop.f32.mrb[0].mxu0
    %v1028 = vpop.f32.mrb[0].mxu0
    %v1029 = vadd.f32 %v793, %v1028
    %v1030 = vpop.f32.mrb[0].mxu0
    %1031 = vmatprep.mubr.bf16.mxu0 0
    %1032 = vmatmul.mubr.bf16.gmra.mrb[0].mxu0 %v672
    %v1033 = vpop.f32.mrb[0].mxu0
    %v1034 = vadd.f32 %v798, %v1033
    %v1035 = vpop.f32.mrb[0].mxu0
    %v1036 = vpop.f32.mrb[0].mxu0
    %v1037 = vpop.f32.mrb[0].mxu0
    %1038 = vdwg.mxu0
    %v1039 = vadd.f32 %v1018, %v911
    %v1040 = vadd.f32 %v1021, %v914
    %v1041 = vadd.f32 %v1026, %v919
    %v1042 = vadd.f32 %v1029, %v922
    %v1043 = vadd.f32 %v1034, %v927
    %v1044 = vld [vmem:[%s5] sm:$0x1]
    %v1046 = vlaneseq
    %v1047 = vshrl.u32 %v1046, 7
    %v1048 = vsub.s32 0, %v1047
    %v1049 = vrot.slane %v1044, %v1048
    %v1051 = vmul.f32 %v1039, %v1049
    %v1052 = vmul.f32 %v1040, %v1049
    %v1053 = vmul.f32 %v1041, %v1049
    %v1054 = vmul.f32 %v1042, %v1049
    %v1055 = vmul.f32 %v1043, %v1049
    %v1056 = vld [vmem:[%s6] sm:$0x1]
    %v1058 = vlaneseq
    %v1059 = vshrl.u32 %v1058, 7
    %v1060 = vsub.s32 0, %v1059
    %v1061 = vrot.slane %v1056, %v1060
    %v1063 = vadd.f32 %v1051, %v1061
    %v1064 = vadd.f32 %v1052, %v1061
    %v1065 = vadd.f32 %v1053, %v1061
    %v1066 = vadd.f32 %v1054, %v1061
    %v1067 = vadd.f32 %v1055, %v1061
    %v1068 = vunpack.c.l.bf16 %v68
    %v1069 = vunpack.c.l.bf16 %v69
    %v1070 = vunpack.c.l.bf16 %v70
    %v1071 = vunpack.c.l.bf16 %v71
    %v1072 = vunpack.c.l.bf16 %v72
    %vm1078 = vcmask 1046528
    %v1079 = vrot.slane %v1068, 1
    %v1080 = vrot.slane %v1069, 1
    %v1081 = vsel %vm1078, %v1079, %v1080
    %v1082 = vrot.slane %v1070, 1
    %v1083 = vsel %vm1078, %v1080, %v1082
    %v1084 = vrot.slane %v1071, 1
    %v1085 = vsel %vm1078, %v1082, %v1084
    %v1086 = vrot.slane %v1072, 1
    %v1087 = vsel %vm1078, %v1084, %v1086
    %v1093 = vadd.f32 %v1063, %v1081
    %v1094 = vadd.f32 %v1064, %v1083
    %v1095 = vadd.f32 %v1065, %v1085
    %v1096 = vadd.f32 %v1066, %v1087
    %v1097 = vadd.f32 %v1067, %v1086
    %v1098 = vmax.f32 %v1093, 0.0
    %v1099 = vmax.f32 %v1094, 0.0
    %v1100 = vmax.f32 %v1095, 0.0
    %v1101 = vmax.f32 %v1096, 0.0
    %v1102 = vmax.f32 %v1097, 0.0
    %1103 = vst [vmem:[%s7] sm:$0xff] %v1098
    %1104 = vst [vmem:[%s7 + $0x8] sm:$0xff] %v1099
    %1105 = vst [vmem:[%s7 + $0x10] sm:$0xff] %v1100
    %1106 = vst [vmem:[%s7 + $0x18] sm:$0xff] %v1101
    %1107 = vst [vmem:[%s7 + $0x20] sm:$0x3] %v1102
    // Predicated region
    $region42: #{tpu_custom_call.1} parent=1 // pred_check
      _
    $region43: #{tpu_custom_call.1} parent=1 // pred_check_branch
      %1109 = sbr.rel (0) target = $region45
    $region44: #{tpu_custom_call.1} parent=1 // pred_region
      _
    $region45: #{tpu_custom_call.1} parent=1 // pred_fallthru
      _
    // Predicated region
    $region46: #{tpu_custom_call.1} parent=1 // pred_check
      _
    $region47: #{tpu_custom_call.1} parent=1 // pred_check_branch
      %1111 = sbr.rel (0) target = $region49
    $region48: #{tpu_custom_call.1} parent=1 // pred_region
      _
    $region49: #{tpu_custom_call.1} parent=1 // pred_fallthru
      _
    %1112 = vsyncpa [#allocation4], 1
    %1113 = vsyncpa [#allocation6], 1

</llo_original>
